<compile_context>
chip_gen: v5e
topology: v5e:2x2
jax: 0.10.0
libtpu: 0.0.40
codegen_flags: <defaults>
</compile_context>

<pallas_src>
import functools

import jax
import jax.numpy as jnp
from jax.experimental import pallas as pl
from jax.experimental.pallas import tpu as pltpu


_HALO = 2       # pad=2 per side covers the k=5 branch; k=3/k=1 use interior taps
_LANE = 128
_SUB = 8


def _round_up(x, m):
    return ((x + m - 1) // m) * m


def _default_vmem_limit():
    """~75% of physical VMEM, capped at 96 MiB (-> ~48 MiB on v7x, 96 MiB on v5e/v6e)."""
    try:
        cap = getattr(pltpu.get_tpu_info(), "vmem_capacity_bytes", None)
        if cap:
            return int(min(cap * 3 // 4, 96 * 1024 * 1024))
    except Exception:
        pass
    return 64 * 1024 * 1024


def _choose_tile_l(L, c_in, cout_p, out_bytes, vmem_limit_bytes, max_tile_l):
    """Largest multiple-of-128 L tile whose working set fits ~75% of the VMEM limit."""
    budget = (vmem_limit_bytes * 3) // 4          # ~25% headroom for compiler scratch
    t = max(_LANE, min(_round_up(max_tile_l, _LANE), _round_up(L, _LANE)))
    while True:
        l_pad = pl.cdiv(L, t) * t
        need = (2 * c_in * (l_pad + 2 * _HALO) * 2          # resident input (bf16), dbl-buf
                + 2 * cout_p * t * out_bytes                # output block, dbl-buf
                + 2 * (5 * cout_p * c_in * 2 + cout_p * 4)  # weights + shift
                + cout_p * t * 4                            # f32 accumulator
                + c_in * (t + 2 * _HALO) * 2)               # in-kernel window temp
        if need <= budget or t <= _LANE:
            return t
        t -= _LANE


def _inception_kernel(x_ref, w_ref, shift_ref, out_ref, *, tile_l):
    # x_ref:     (1, Cin, L_pad + 4)   bf16  -- whole padded input row of this batch
    # w_ref:     (5, Cout_p, Cin)      bf16  -- BN-folded weights, one slice per conv tap
    # shift_ref: (Cout_p, 1)           f32   -- folded BN shift (zeros in padded channels)
    # out_ref:   (1, Cout_p, tile_l)   out dtype
    start = pl.multiple_of(pl.program_id(1) * tile_l, _LANE)
    xw = x_ref[0, :, pl.ds(start, tile_l + 2 * _HALO)]        # (Cin, tile_l + 4)

    acc = jnp.zeros(out_ref.shape[1:], jnp.float32)           # (Cout_p, tile_l)
    for t in range(5):                                        # 5-tap accumulation on MXU
        acc = acc + jnp.dot(w_ref[t], xw[:, t:t + tile_l],
                            preferred_element_type=jnp.float32)

    out_ref[0] = jnp.maximum(acc + shift_ref[...], 0.0).astype(out_ref.dtype)


def inception_block_1d(x, w_all, shift, out_channels, *,
                       out_dtype=jnp.bfloat16,
                       max_tile_l=2048,
                       vmem_limit_bytes=None):
    """x: (N, C_in, L) float32, PyTorch NCL layout. Returns (N, out_channels, L)."""
    N, c_in, L = x.shape
    n_taps, cout_p, w_cin = w_all.shape
    assert n_taps == 5 and w_cin == c_in

    if vmem_limit_bytes is None:
        vmem_limit_bytes = _default_vmem_limit()
    out_bytes = jnp.dtype(out_dtype).itemsize
    tile_l = _choose_tile_l(L, c_in, cout_p, out_bytes, vmem_limit_bytes, max_tile_l)
    n_tiles = pl.cdiv(L, tile_l)
    l_pad = n_tiles * tile_l

    if 2 * c_in * (l_pad + 2 * _HALO) * 2 > (vmem_limit_bytes * 3) // 4:
        # TODO(synk): switch the input to memory_space=pl.ANY + manual
        # double-buffered make_async_copy (P4) when one batch row of the input
        # no longer fits in VMEM.
        raise ValueError("per-batch input does not fit in VMEM; reduce L or c_in")

    # Cast to bf16 + zero-pad (halo of 2 each side for k=5/pad=2 plus L -> multiple
    # of tile_l).  One fused elementwise HBM pass; no layout transpose.
    x_p = jnp.pad(x.astype(jnp.bfloat16),
                  ((0, 0), (0, 0), (_HALO, _HALO + l_pad - L)))

    flops = 2 * N * l_pad * (5 * c_in) * cout_p
    bytes_accessed = (N * c_in * (l_pad + 2 * _HALO) * 2        # bf16 input
                      + N * cout_p * l_pad * out_bytes          # output
                      + 5 * cout_p * c_in * 2 + cout_p * 4)     # weights + shift

    kernel = functools.partial(_inception_kernel, tile_l=tile_l)
    out = pl.pallas_call(
        kernel,
        out_shape=jax.ShapeDtypeStruct((N, cout_p, l_pad), out_dtype),
        grid_spec=pltpu.PrefetchScalarGridSpec(
            num_scalar_prefetch=0,
            grid=(N, n_tiles),
            in_specs=[
                # Whole padded batch row: the block index depends only on n, so
                # it is DMA'd once per batch row and stays resident across the
                # L tiles of that row.
                pl.BlockSpec((1, c_in, l_pad + 2 * _HALO), lambda n, j: (n, 0, 0)),
                pl.BlockSpec((5, cout_p, c_in), lambda n, j: (0, 0, 0)),
                pl.BlockSpec((cout_p, 1), lambda n, j: (0, 0)),
            ],
            out_specs=pl.BlockSpec((1, cout_p, tile_l), lambda n, j: (n, 0, j)),
        ),
        compiler_params=pltpu.CompilerParams(
            dimension_semantics=("parallel", "parallel"),
            vmem_limit_bytes=int(vmem_limit_bytes)),
        cost_estimate=pl.CostEstimate(flops=flops, transcendentals=0,
                                      bytes_accessed=bytes_accessed),
    )(x_p, w_all, shift)

    # Strip channel padding (8-sublane round-up) and L padding; output stays NCL.
    return out[:, :out_channels, :L]


def make_params(key, in_channels, out_channels, eps=1e-5):
    """Deterministic conv + BN params, BN-folded and packed for the 5-tap kernel.

    PyTorch conv weight layout is (C_out, C_in, K); we fold the BN scale
    gamma/sqrt(var+eps) into the weight and pack the four branches into one
    (5, Cout_p, Cin) bf16 tensor (zero slices for taps a branch does not use).
    The folded shift beta - mean*scale stays in f32.
    """
    assert out_channels % 4 == 0, "InceptionBlock1D requires out_channels % 4 == 0"
    q = out_channels // 4
    cout_p = _round_up(4 * q, _SUB)
    ks = jax.random.split(key, 4)
    kernel_sizes = (1, 3, 5, 1)

    branch_w, branch_shift = [], []
    for b, (k_sz, kk) in enumerate(zip(kernel_sizes, ks)):
        w = 0.1 * jax.random.normal(kk, (q, in_channels, k_sz), jnp.float32)
        gamma = 1.0 + 0.1 * jnp.arange(q, dtype=jnp.float32) + 0.01 * b
        beta = 0.05 * jnp.arange(q, dtype=jnp.float32) - 0.02 * b
        r_mean = 0.01 * jnp.arange(q, dtype=jnp.float32)
        r_var = 1.0 + 0.05 * jnp.arange(q, dtype=jnp.float32)
        scale = gamma / jnp.sqrt(r_var + eps)                       # (q,)
        shift = beta - r_mean * scale                               # (q,)
        w_kic = jnp.transpose(w, (2, 1, 0)) * scale[None, None, :]  # (K, Cin, q), folded
        branch_w.append(w_kic)
        branch_shift.append(shift)

    w1, w3, w5, wp = branch_w
    # Output position l reads padded position l + t (left pad = 2), so:
    # k=1 branches use tap 2, k=3 uses taps 1..3, k=5 uses taps 0..4.
    W = jnp.zeros((5, cout_p, in_channels), jnp.float32)
    W = W.at[2, 0 * q:1 * q, :].set(w1[0].T)
    W = W.at[1:4, 1 * q:2 * q, :].set(jnp.transpose(w3, (0, 2, 1)))
    W = W.at[0:5, 2 * q:3 * q, :].set(jnp.transpose(w5, (0, 2, 1)))
    W = W.at[2, 3 * q:4 * q, :].set(wp[0].T)

    shift_all = jnp.zeros((cout_p,), jnp.float32).at[:4 * q].set(
        jnp.concatenate(branch_shift))

    return {
        "w_all": W.astype(jnp.bfloat16),       # (5, Cout_p, Cin) bf16
        "shift": shift_all[:, None],           # (Cout_p, 1) f32
        "out_channels": 4 * q,
        "branch_w": tuple(branch_w),           # f32 folded, for the pure-JAX reference
        "branch_shift": tuple(branch_shift),
    }


def reference_forward(x, branch_w, branch_shift):
    """Pure-JAX reference (same BN folding; matmul operands bf16-rounded like the kernel)."""
    w1, w3, w5, wp = branch_w
    s1, s2, s3, s4 = branch_shift
    N, c_in, L = x.shape
    hp = jax.lax.Precision.HIGHEST
    rnd = lambda a: a.astype(jnp.bfloat16).astype(jnp.float32)

    x_nlc = jnp.transpose(rnd(x), (0, 2, 1))
    xp = jnp.pad(x_nlc, ((0, 0), (2, 2), (0, 0)))
    xc = xp[:, 2:2 + L]
    b1 = jnp.einsum("nlc,cq->nlq", xc, rnd(w1[0]), precision=hp) + s1
    b2 = sum(jnp.einsum("nlc,cq->nlq", xp[:, 1 + t:1 + t + L], rnd(w3[t]),
                        precision=hp) for t in range(3)) + s2
    b3 = sum(jnp.einsum("nlc,cq->nlq", xp[:, t:t + L], rnd(w5[t]),
                        precision=hp) for t in range(5)) + s3
    b4 = jnp.einsum("nlc,cq->nlq", xc, rnd(wp[0]), precision=hp) + s4
    out = jnp.maximum(jnp.concatenate([b1, b2, b3, b4], axis=-1), 0.0)
    return jnp.transpose(out, (0, 2, 1))


if __name__ == "__main__":
    N, C_in, L = 2, 4, 16
    out_channels = 16

    key = jax.random.PRNGKey(0)
    kx, kp = jax.random.split(key)
    x = jax.random.normal(kx, (N, C_in, L), jnp.float32)
    params = make_params(kp, C_in, out_channels)

    out = inception_block_1d(x, params["w_all"], params["shift"],
                             params["out_channels"])
    out = jax.block_until_ready(out)

    ref = reference_forward(x, params["branch_w"], params["branch_shift"])
    assert out.shape == (N, out_channels, L)
    assert out.dtype == jnp.bfloat16
    assert jnp.allclose(out.astype(jnp.float32), ref, atol=2e-2, rtol=2e-2), \
        "mismatch vs reference"
    print("KERNEL_OK")
</pallas_src>

<mosaic_0001>
module attributes {stable_mosaic.version = 11 : i64} {
  func.func @_inception_kernel(%arg0: i32, %arg1: i32, %arg2: memref<1x4x132xbf16, #tpu.memory_space<vmem>>, %arg3: memref<5x16x4xbf16, #tpu.memory_space<vmem>>, %arg4: memref<16x1xf32, #tpu.memory_space<vmem>>, %arg5: memref<1x16x128xbf16, #tpu.memory_space<vmem>>) attributes {dimension_semantics = [#tpu.dimension_semantics<parallel>, #tpu.dimension_semantics<parallel>], iteration_bounds = array<i64: 2, 1>, scalar_prefetch = 0 : i64, scratch_operands = 0 : i64, tpu.core_type = #tpu.core_type<tc>, window_params = [{transform_indices = @transform_0, window_bounds = array<i64: 1, 4, 132>}, {pipeline_mode = #tpu.pipeline_mode<synchronous>, transform_indices = @transform_1, window_bounds = array<i64: 5, 16, 4>}, {pipeline_mode = #tpu.pipeline_mode<synchronous>, transform_indices = @transform_2, window_bounds = array<i64: 16, 1>}, {transform_indices = @transform_3, window_bounds = array<i64: 1, 16, 128>}]} {
    %c128_i32 = arith.constant 128 : i32
    %0 = arith.muli %arg1, %c128_i32 : i32
    %1 = tpu.assume_multiple %0, 128 : i32
    %c0 = arith.constant 0 : index
    %c0_0 = arith.constant 0 : index
    %2 = arith.index_cast %1 : i32 to index
    %3 = vector.load %arg2[%c0, %c0_0, %2] : memref<1x4x132xbf16, #tpu.memory_space<vmem>>, vector<1x4x132xbf16>
    %4 = vector.shape_cast %3 : vector<1x4x132xbf16> to vector<4x132xbf16>
    %cst = arith.constant 0.000000e+00 : f32
    %5 = vector.broadcast %cst : f32 to vector<16x128xf32>
    %c0_1 = arith.constant 0 : index
    %c0_2 = arith.constant 0 : index
    %c0_3 = arith.constant 0 : index
    %6 = vector.load %arg3[%c0_1, %c0_2, %c0_3] : memref<5x16x4xbf16, #tpu.memory_space<vmem>>, vector<1x16x4xbf16>
    %7 = vector.shape_cast %6 : vector<1x16x4xbf16> to vector<16x4xbf16>
    %8 = vector.extract_strided_slice %4 {offsets = [0, 0], sizes = [4, 128], strides = [1, 1]} : vector<4x132xbf16> to vector<4x128xbf16>
    %cst_4 = arith.constant dense<0.000000e+00> : vector<16x128xf32>
    %9 = tpu.matmul %7, %8, %cst_4 {dimension_numbers = #tpu.dot_dimension_numbers<[1], [0], [0], [1], [0, 0, 1, 1], [], []>} : vector<16x4xbf16>, vector<4x128xbf16>, vector<16x128xf32> -> vector<16x128xf32>
    %10 = arith.addf %5, %9 : vector<16x128xf32>
    %c1 = arith.constant 1 : index
    %c0_5 = arith.constant 0 : index
    %c0_6 = arith.constant 0 : index
    %11 = vector.load %arg3[%c1, %c0_5, %c0_6] : memref<5x16x4xbf16, #tpu.memory_space<vmem>>, vector<1x16x4xbf16>
    %12 = vector.shape_cast %11 : vector<1x16x4xbf16> to vector<16x4xbf16>
    %13 = vector.extract_strided_slice %4 {offsets = [0, 1], sizes = [4, 128], strides = [1, 1]} : vector<4x132xbf16> to vector<4x128xbf16>
    %cst_7 = arith.constant dense<0.000000e+00> : vector<16x128xf32>
    %14 = tpu.matmul %12, %13, %cst_7 {dimension_numbers = #tpu.dot_dimension_numbers<[1], [0], [0], [1], [0, 0, 1, 1], [], []>} : vector<16x4xbf16>, vector<4x128xbf16>, vector<16x128xf32> -> vector<16x128xf32>
    %15 = arith.addf %10, %14 : vector<16x128xf32>
    %c2 = arith.constant 2 : index
    %c0_8 = arith.constant 0 : index
    %c0_9 = arith.constant 0 : index
    %16 = vector.load %arg3[%c2, %c0_8, %c0_9] : memref<5x16x4xbf16, #tpu.memory_space<vmem>>, vector<1x16x4xbf16>
    %17 = vector.shape_cast %16 : vector<1x16x4xbf16> to vector<16x4xbf16>
    %18 = vector.extract_strided_slice %4 {offsets = [0, 2], sizes = [4, 128], strides = [1, 1]} : vector<4x132xbf16> to vector<4x128xbf16>
    %cst_10 = arith.constant dense<0.000000e+00> : vector<16x128xf32>
    %19 = tpu.matmul %17, %18, %cst_10 {dimension_numbers = #tpu.dot_dimension_numbers<[1], [0], [0], [1], [0, 0, 1, 1], [], []>} : vector<16x4xbf16>, vector<4x128xbf16>, vector<16x128xf32> -> vector<16x128xf32>
    %20 = arith.addf %15, %19 : vector<16x128xf32>
    %c3 = arith.constant 3 : index
    %c0_11 = arith.constant 0 : index
    %c0_12 = arith.constant 0 : index
    %21 = vector.load %arg3[%c3, %c0_11, %c0_12] : memref<5x16x4xbf16, #tpu.memory_space<vmem>>, vector<1x16x4xbf16>
    %22 = vector.shape_cast %21 : vector<1x16x4xbf16> to vector<16x4xbf16>
    %23 = vector.extract_strided_slice %4 {offsets = [0, 3], sizes = [4, 128], strides = [1, 1]} : vector<4x132xbf16> to vector<4x128xbf16>
    %cst_13 = arith.constant dense<0.000000e+00> : vector<16x128xf32>
    %24 = tpu.matmul %22, %23, %cst_13 {dimension_numbers = #tpu.dot_dimension_numbers<[1], [0], [0], [1], [0, 0, 1, 1], [], []>} : vector<16x4xbf16>, vector<4x128xbf16>, vector<16x128xf32> -> vector<16x128xf32>
    %25 = arith.addf %20, %24 : vector<16x128xf32>
    %c4 = arith.constant 4 : index
    %c0_14 = arith.constant 0 : index
    %c0_15 = arith.constant 0 : index
    %26 = vector.load %arg3[%c4, %c0_14, %c0_15] : memref<5x16x4xbf16, #tpu.memory_space<vmem>>, vector<1x16x4xbf16>
    %27 = vector.shape_cast %26 : vector<1x16x4xbf16> to vector<16x4xbf16>
    %28 = vector.extract_strided_slice %4 {offsets = [0, 4], sizes = [4, 128], strides = [1, 1]} : vector<4x132xbf16> to vector<4x128xbf16>
    %cst_16 = arith.constant dense<0.000000e+00> : vector<16x128xf32>
    %29 = tpu.matmul %27, %28, %cst_16 {dimension_numbers = #tpu.dot_dimension_numbers<[1], [0], [0], [1], [0, 0, 1, 1], [], []>} : vector<16x4xbf16>, vector<4x128xbf16>, vector<16x128xf32> -> vector<16x128xf32>
    %30 = arith.addf %25, %29 : vector<16x128xf32>
    %c0_17 = arith.constant 0 : index
    %c0_18 = arith.constant 0 : index
    %31 = vector.load %arg4[%c0_17, %c0_18] : memref<16x1xf32, #tpu.memory_space<vmem>>, vector<16x1xf32>
    %32 = vector.broadcast %31 : vector<16x1xf32> to vector<16x128xf32>
    %33 = arith.addf %30, %32 : vector<16x128xf32>
    %cst_19 = arith.constant 0.000000e+00 : f32
    %34 = vector.broadcast %cst_19 : f32 to vector<16x128xf32>
    %35 = arith.maximumf %33, %34 : vector<16x128xf32>
    %36 = arith.truncf %35 : vector<16x128xf32> to vector<16x128xbf16>
    %c0_20 = arith.constant 0 : index
    %c0_21 = arith.constant 0 : index
    %c0_22 = arith.constant 0 : index
    %37 = vector.load %arg5[%c0_20, %c0_21, %c0_22] : memref<1x16x128xbf16, #tpu.memory_space<vmem>>, vector<1x16x128xbf16>
    %38 = vector.shape_cast %37 : vector<1x16x128xbf16> to vector<16x128xbf16>
    %39 = vector.shape_cast %36 : vector<16x128xbf16> to vector<1x16x128xbf16>
    tpu.vector_store %arg5[%c0_20, %c0_21, %c0_22], %39 {strides = array<i32>} : memref<1x16x128xbf16, #tpu.memory_space<vmem>>, vector<1x16x128xbf16>,
    return
  }
  func.func @transform_0(%arg0: i32, %arg1: i32) -> (i32, i32, i32) {
    %c0_i32 = arith.constant 0 : i32
    %c0_i32_0 = arith.constant 0 : i32
    %c0_i32_1 = arith.constant 0 : i32
    return %arg0, %c0_i32, %c0_i32_0 : i32, i32, i32
  }
  func.func @transform_1(%arg0: i32, %arg1: i32) -> (i32, i32, i32) {
    %c0_i32 = arith.constant 0 : i32
    %c0_i32_0 = arith.constant 0 : i32
    %c0_i32_1 = arith.constant 0 : i32
    %c0_i32_2 = arith.constant 0 : i32
    return %c0_i32, %c0_i32_0, %c0_i32_1 : i32, i32, i32
  }
  func.func @transform_2(%arg0: i32, %arg1: i32) -> (i32, i32) {
    %c0_i32 = arith.constant 0 : i32
    %c0_i32_0 = arith.constant 0 : i32
    %c0_i32_1 = arith.constant 0 : i32
    return %c0_i32, %c0_i32_0 : i32, i32
  }
  func.func @transform_3(%arg0: i32, %arg1: i32) -> (i32, i32, i32) {
    %c0_i32 = arith.constant 0 : i32
    %c0_i32_0 = arith.constant 0 : i32
    return %arg0, %c0_i32, %arg1 : i32, i32, i32
  }
}

</mosaic_0001>

<llo_original>
// kernel: tpu_custom_call.1
$region0: #{tpu_custom_call.1}
  #allocation0 [shape = 'u32[]', space=smem, size = 0x4, offset = 0x4, fixed_abs, tag = 'smem constant byte address 0x4 - core index']
  #allocation1 [shape = 'u32[72,128]{1,0:T(1,128)}', space=vmem, size = 0x9000, scoped, tag = 'internal scratch']
  %s0 = inlined_call_operand.vmem [shape: bf16[2,4,132], index: 0, kind: input, shape index: {}]
  %s1 = inlined_call_operand.vmem [shape: bf16[5,16,4], index: 1, kind: input, shape index: {}]
  %s2 = inlined_call_operand.vmem [shape: f32[16,1], index: 2, kind: input, shape index: {}]
  %s3 = inlined_call_operand.hbm [shape: bf16[2,16,128], index: 3, kind: output, shape index: {}]
  %s4 = sld [smem:[#allocation0]]
  $region45: #{tpu_custom_call.1} parent=0
    _
  %s6 = ssub.s32 1, %s4
  %s7 = scalar_select 0, %s6, %s4
  $region1: #{tpu_custom_call.1} parent=0
    #allocation2 [shape = 'u8[8192]{0}', space=vmem, size = 0x2000, scoped, tag = 'output window, operand 0']
    #allocation3 [shape = 's32[2]{0}', space=sflag, size = 0x8, scoped, tag = 'scoped memory for tpu_custom_call.1']
    %8 = vsyncpa [#allocation3], 0
    %s9 = scalar_lea.sflag [#allocation3], 1
    %10 = vsyncpa %s9, 0
    loop: start=0, step=1, limit=4
    $region2: #{tpu_custom_call.1} parent=1 // loop_pre_header
      _
    $region3: #{tpu_custom_call.1} parent=1 // loop_header
      %s12 = sphi 0, %s16
      %p13 = scmp.ge.s32.totalorder %s12, 4
      %s19 = sphi 0, %s31
      %s20 = sphi 0, %s27
      %s21 = sphi 0, %s19
      %s22 = sphi 0, %s20
      %s23 = sphi 0, %s21
      %s24 = sphi 0, %s22
      %s34 = sphi 0, %s36
      %s37 = sphi 0, %s34
      %s38 = sphi 0, %s37
      %s54 = sphi 0, %s38
      %s58 = sphi 0, %s58
      %s60 = sphi 0, %s58
      %s61 = sphi 0, %s60
      %s75 = sphi 0, %s61
      %s79 = sphi 0, %s79
      %s81 = sphi 0, %s79
      %s82 = sphi 0, %s81
      %s96 = sphi 0, %s82
      %s104 = sphi 0, %s106
      %s107 = sphi 0, %s104
      %s108 = sphi 0, %s107
      %s124 = sphi 0, %s108
    $region4: #{tpu_custom_call.1} parent=1 // loop_header_branch
      %15 = sbr.rel (%p13) target = $region8
    $region5: #{tpu_custom_call.1} parent=1 // loop_body
      %s17 = ssub.s32 %s12, 1
      %s18 = ssub.s32 %s12, 2
      %s25 = sadd.s32 1, %s20
      %p26 = scmp.ge.s32.totalorder %s25, 1
      %s27 = scalar_select %p26, 0, %s25
      %s28 = sadd.s32 1, %s19
      %s29 = scalar_select %p26, %s28, %s19
      %p30 = scmp.ge.s32.totalorder %s29, 2
      %s31 = scalar_select %p30, 0, %s29
      %s32 = ssub.s32 %s19, %s31
      %p33 = scmp.eq.s32.totalorder %s32, 0
      %s35 = sadd.s32 %s34, 1
      %s36 = scalar_select %p33, %s34, %s35
      %p39 = pneg %p33
      %p40 = scmp.eq.s32.totalorder %s12, 1
      %p41 = por %p39, %p40
      %p42 = scmp.ne.s32.totalorder %s34, %s37
      %p43 = scmp.eq.s32.totalorder %s12, 0
      %p44 = por %p42, %p43
      %p45 = scmp.ne.s32.totalorder %s34, %s37
      %p46 = scmp.eq.s32.totalorder %s17, 1
      %p47 = por %p45, %p46
      %p48 = scmp.ne.s32.totalorder %s37, %s38
      %p49 = scmp.eq.s32.totalorder %s17, 0
      %p50 = por %p48, %p49
      %p51 = scmp.ne.s32.totalorder %s37, %s38
      %p52 = scmp.eq.s32.totalorder %s18, 1
      %p53 = por %p51, %p52
      %p55 = scmp.ne.s32.totalorder %s38, %s54
      %p56 = scmp.eq.s32.totalorder %s18, 0
      %p57 = por %p55, %p56
      %s59 = sadd.s32 %s58, 1
      %p62 = scmp.eq.s32.totalorder %s12, 1
      %p63 = scmp.ne.s32.totalorder %s58, %s60
      %p64 = scmp.eq.s32.totalorder %s12, 0
      %p65 = por %p63, %p64
      %p66 = scmp.ne.s32.totalorder %s58, %s60
      %p67 = scmp.eq.s32.totalorder %s17, 1
      %p68 = por %p66, %p67
      %p69 = scmp.ne.s32.totalorder %s60, %s61
      %p70 = scmp.eq.s32.totalorder %s17, 0
      %p71 = por %p69, %p70
      %p72 = scmp.ne.s32.totalorder %s60, %s61
      %p73 = scmp.eq.s32.totalorder %s18, 1
      %p74 = por %p72, %p73
      %p76 = scmp.ne.s32.totalorder %s61, %s75
      %p77 = scmp.eq.s32.totalorder %s18, 0
      %p78 = por %p76, %p77
      %s80 = sadd.s32 %s79, 1
      %p83 = scmp.eq.s32.totalorder %s12, 1
      %p84 = scmp.ne.s32.totalorder %s79, %s81
      %p85 = scmp.eq.s32.totalorder %s12, 0
      %p86 = por %p84, %p85
      %p87 = scmp.ne.s32.totalorder %s79, %s81
      %p88 = scmp.eq.s32.totalorder %s17, 1
      %p89 = por %p87, %p88
      %p90 = scmp.ne.s32.totalorder %s81, %s82
      %p91 = scmp.eq.s32.totalorder %s17, 0
      %p92 = por %p90, %p91
      %p93 = scmp.ne.s32.totalorder %s81, %s82
      %p94 = scmp.eq.s32.totalorder %s18, 1
      %p95 = por %p93, %p94
      %p97 = scmp.ne.s32.totalorder %s82, %s96
      %p98 = scmp.eq.s32.totalorder %s18, 0
      %p99 = por %p97, %p98
      %s100 = ssub.s32 %s19, %s31
      %s101 = ssub.s32 %s20, %s27
      %s102 = sor.u32 %s100, %s101
      %p103 = scmp.eq.s32.totalorder %s102, 0
      %s105 = sadd.s32 %s104, 1
      %s106 = scalar_select %p103, %s104, %s105
      %p109 = pneg %p103
      %p110 = scmp.eq.s32.totalorder %s12, 1
      %p111 = por %p109, %p110
      %p112 = scmp.ne.s32.totalorder %s104, %s107
      %p113 = scmp.eq.s32.totalorder %s12, 0
      %p114 = por %p112, %p113
      %p115 = scmp.ne.s32.totalorder %s104, %s107
      %p116 = scmp.eq.s32.totalorder %s17, 1
      %p117 = por %p115, %p116
      %p118 = scmp.ne.s32.totalorder %s107, %s108
      %p119 = scmp.eq.s32.totalorder %s17, 0
      %p120 = por %p118, %p119
      %p121 = scmp.ne.s32.totalorder %s107, %s108
      %p122 = scmp.eq.s32.totalorder %s18, 1
      %p123 = por %p121, %p122
      %p125 = scmp.ne.s32.totalorder %s108, %s124
      %p126 = scmp.eq.s32.totalorder %s18, 0
      %p127 = por %p125, %p126
      %p128 = scmp.le.s32.totalorder 1, %s12
      %p129 = scmp.lt.s32.totalorder %s12, 3
      %p130 = pnand %p128, %p129
      %p131 = pneg %p130
      // Predicated region
      $region9: #{tpu_custom_call.1} parent=5 // pred_check
        _
      $region10: #{tpu_custom_call.1} parent=5 // pred_check_branch
        %133 = sbr.rel (%p130) target = $region12
      $region11: #{tpu_custom_call.1} parent=5 // pred_region
        %s134 = ssub.s32 %s12, 1
        // Predicated region
        $region13: #{tpu_custom_call.1} parent=11 // pred_check
          %p135 = pneg %p71
        $region14: #{tpu_custom_call.1} parent=11 // pred_check_branch
          %137 = sbr.rel (%p135) target = $region16
        $region15: #{tpu_custom_call.1} parent=11 // pred_region
          _
        $region16: #{tpu_custom_call.1} parent=11 // pred_fallthru
          _
        // Predicated region
        $region17: #{tpu_custom_call.1} parent=11 // pred_check
          %p138 = pneg %p92
        $region18: #{tpu_custom_call.1} parent=11 // pred_check_branch
          %140 = sbr.rel (%p138) target = $region20
        $region19: #{tpu_custom_call.1} parent=11 // pred_region
          _
        $region20: #{tpu_custom_call.1} parent=11 // pred_fallthru
          _
      $region12: #{tpu_custom_call.1} parent=5 // pred_fallthru
        _
      %p141 = scmp.lt.s32.totalorder %s12, 2
      // Predicated region
      $region21: #{tpu_custom_call.1} parent=5 // pred_check
        %p142 = pneg %p141
      $region22: #{tpu_custom_call.1} parent=5 // pred_check_branch
        %144 = sbr.rel (%p142) target = $region24
      $region23: #{tpu_custom_call.1} parent=5 // pred_region
        // Predicated region
        $region25: #{tpu_custom_call.1} parent=23 // pred_check
          %p145 = pneg %p44
        $region26: #{tpu_custom_call.1} parent=23 // pred_check_branch
          %147 = sbr.rel (%p145) target = $region28
        $region27: #{tpu_custom_call.1} parent=23 // pred_region
          %p148 = scmp.lt.s32.totalorder %s19, 1
          %s149 = scalar_select %p148, %s19, 1
          %s150 = smul.addr %s149, 2
          %s151 = smul.addr %s150, 2
          %s152 = scalar_lea.vmem %s0, %s151
        $region28: #{tpu_custom_call.1} parent=23 // pred_fallthru
          _
      $region24: #{tpu_custom_call.1} parent=5 // pred_fallthru
        _
      %p153 = scmp.le.s32.totalorder 1, %s12
      %p154 = scmp.lt.s32.totalorder %s12, 3
      %p155 = pnand %p153, %p154
      %p156 = pneg %p155
      // Predicated region
      $region29: #{tpu_custom_call.1} parent=5 // pred_check
        _
      $region30: #{tpu_custom_call.1} parent=5 // pred_check_branch
        %158 = sbr.rel (%p155) target = $region32
      $region31: #{tpu_custom_call.1} parent=5 // pred_region
        %s159 = ssub.s32 %s12, 1
        %p160 = scmp.lt.s32.totalorder %s21, 1
        %s161 = scalar_select %p160, %s21, 1
        %s162 = smul.addr %s161, 2
        %s163 = smul.addr %s162, 2
        %s164 = scalar_lea.vmem %s0, %s163
        %p165 = pneg %p50
        %p166 = pneg %p47
        %p167 = pneg %p71
        %p168 = pneg %p68
        %p169 = pneg %p92
        %p170 = pneg %p89
        %p171 = pneg %p120
        %p172 = pneg %p117
        %s173 = sand.u32 %s107, 1
        %s174 = scalar_lea.sflag [#allocation3], %s173
        %s175 = sand.u32 %s107, 1
        %s176 = smul.addr %s175, 8
        %s177 = scalar_lea.vmem [#allocation2], %s176
        %p178 = scmp.lt.s32.totalorder %s21, 1
        %s179 = scalar_select %p178, %s21, 1
        %s180 = smul.addr %s179, 2
        %s181 = smul.addr %s180, 2
        %s182 = scalar_lea.vmem %s0, %s181
        %s184 = smul.u32 %s22, 128
        %s185 = sshra.s32 %s184, 7
        %s186 = sand.u32 %s184, 127
        %s187 = smul.addr %s185, 2
        %s188 = scalar_lea.vmem %s182, %s187
        %v189 = vld [vmem:[%s188] sm:$0xf]
        %v190 = vld [vmem:[%s1] sm:$0xf]
        %v191 = vld [vmem:[%s1 + $0x4] sm:$0xf]
        %s192 = scalar_lea.vmem %s1, 8
        %v193 = vld [vmem:[%s192] sm:$0xf]
        %v194 = vld [vmem:[%s192 + $0x4] sm:$0xf]
        %v197 = vunpack.c.l.b16 %v193
        %v198 = vunpack.c.l.b16 %v194
        %v199 = vpack.c.b16 %v198, %v197
        %201 = vst [vmem:[#allocation1] ss:$4 sm:$0xff] %v189
        %v202 = vld.sshfl [vmem:[#allocation1] sm:$0xff pattern:$0x73625140]
        %v204 = vld.sshfl [vmem:[#allocation1 + $0x8] sm:$0xff pattern:$0x73625140]
        %206 = vrot.lane.b32.xlu0 %v202, 127
        %v207 = vpop.permute.xlu0 %206
        %208 = vrot.lane.b32.xlu0 %v204, 127
        %v209 = vpop.permute.xlu0 %208
        %vm210 = vcmask 1039360
        %v211 = vsel %vm210, %v207, %v209
        %vm212 = vcmask 31744
        %v214 = vsel %vm212, %v199, 0
        %vm216 = vcmask 1041408
        %v218 = vsel %vm216, %v211, 0
        %220 = vmatpush.bf16.msra.mxu0 0
        %221 = vmatpush.bf16.msra.mxu0 0
        %222 = vmatpush.bf16.msra.mxu0 0
        %223 = vmatpush.bf16.msra.mxu0 0
        %224 = vmatpush.bf16.msra.mxu0 0
        %225 = vmatpush.bf16.msra.mxu0 0
        %226 = vmatpush.bf16.msra.mxu0 0
        %227 = vmatpush.bf16.msra.mxu0 %v218
        %228 = vmatmul.bf16.gmra.mxu0 %v214
        %v229 = vpop.f32.mrf.mxu0
        %v230 = vadd.f32 0.0, %v229
        %v231 = vpop.f32.mrf.mxu0
        %v232 = vadd.f32 0.0, %v231
        %233 = vdwg.mxu0
        %v236 = vunpack.c.l.b16 %v190
        %v237 = vunpack.c.l.b16 %v191
        %v238 = vpack.c.b16 %v237, %v236
        %v240 = vsel %vm212, %v238, 0
        %v242 = vsel %vm216, %v189, 0
        %244 = vmatpush.bf16.msra.mxu0 0
        %245 = vmatpush.bf16.msra.mxu0 0
        %246 = vmatpush.bf16.msra.mxu0 0
        %247 = vmatpush.bf16.msra.mxu0 0
        %248 = vmatpush.bf16.msra.mxu0 0
        %249 = vmatpush.bf16.msra.mxu0 0
        %250 = vmatpush.bf16.msra.mxu0 0
        %251 = vmatpush.bf16.msra.mxu0 %v242
        %252 = vmatmul.bf16.gmra.mxu0 %v240
        %v253 = vpop.f32.mrf.mxu0
        %v254 = vadd.f32 %v230, %v253
        %v255 = vpop.f32.mrf.mxu0
        %v256 = vadd.f32 %v232, %v255
        %257 = vdwg.mxu0
        %s258 = scalar_lea.vmem %s1, 16
        %v259 = vld [vmem:[%s258] sm:$0xf]
        %v260 = vld [vmem:[%s258 + $0x4] sm:$0xf]
        %v263 = vunpack.c.l.b16 %v259
        %v264 = vunpack.c.l.b16 %v260
        %v265 = vpack.c.b16 %v264, %v263
        %266 = vst [vmem:[#allocation1] ss:$4 sm:$0xff] %v189
        %v267 = vld.sshfl [vmem:[#allocation1] sm:$0xff pattern:$0x73625140]
        %v269 = vld.sshfl [vmem:[#allocation1 + $0x8] sm:$0xff pattern:$0x73625140]
        %271 = vrot.lane.b32.xlu0 %v267, 126
        %v272 = vpop.permute.xlu0 %271
        %273 = vrot.lane.b32.xlu0 %v269, 126
        %v274 = vpop.permute.xlu0 %273
        %vm275 = vcmask 1031168
        %v276 = vsel %vm275, %v272, %v274
        %v278 = vsel %vm212, %v265, 0
        %v281 = vsel %vm216, %v276, 0
        %283 = vmatpush.bf16.msra.mxu0 0
        %284 = vmatpush.bf16.msra.mxu0 0
        %285 = vmatpush.bf16.msra.mxu0 0
        %286 = vmatpush.bf16.msra.mxu0 0
        %287 = vmatpush.bf16.msra.mxu0 0
        %288 = vmatpush.bf16.msra.mxu0 0
        %289 = vmatpush.bf16.msra.mxu0 0
        %290 = vmatpush.bf16.msra.mxu0 %v281
        %291 = vmatmul.bf16.gmra.mxu0 %v278
        %v292 = vpop.f32.mrf.mxu0
        %v293 = vadd.f32 0.0, %v292
        %v294 = vpop.f32.mrf.mxu0
        %v295 = vadd.f32 0.0, %v294
        %296 = vdwg.mxu0
        %v297 = vadd.f32 %v254, %v293
        %v298 = vadd.f32 %v256, %v295
        %s299 = scalar_lea.vmem %s1, 24
        %v300 = vld [vmem:[%s299] sm:$0xf]
        %v301 = vld [vmem:[%s299 + $0x4] sm:$0xf]
        %v304 = vunpack.c.l.b16 %v300
        %v305 = vunpack.c.l.b16 %v301
        %v306 = vpack.c.b16 %v305, %v304
        %307 = vst [vmem:[#allocation1] ss:$4 sm:$0xff] %v189
        %v308 = vld.sshfl [vmem:[#allocation1] sm:$0xff pattern:$0x73625140]
        %v310 = vld.sshfl [vmem:[#allocation1 + $0x8] sm:$0xff pattern:$0x73625140]
        %312 = vrot.lane.b32.xlu0 %v308, 125
        %v313 = vpop.permute.xlu0 %312
        %314 = vrot.lane.b32.xlu0 %v310, 125
        %v315 = vpop.permute.xlu0 %314
        %vm316 = vcmask 1022976
        %v317 = vsel %vm316, %v313, %v315
        %v319 = vsel %vm212, %v306, 0
        %v322 = vsel %vm216, %v317, 0
        %324 = vmatpush.bf16.msra.mxu0 0
        %325 = vmatpush.bf16.msra.mxu0 0
        %326 = vmatpush.bf16.msra.mxu0 0
        %327 = vmatpush.bf16.msra.mxu0 0
        %328 = vmatpush.bf16.msra.mxu0 0
        %329 = vmatpush.bf16.msra.mxu0 0
        %330 = vmatpush.bf16.msra.mxu0 0
        %331 = vmatpush.bf16.msra.mxu0 %v322
        %332 = vmatmul.bf16.gmra.mxu0 %v319
        %v333 = vpop.f32.mrf.mxu0
        %v334 = vadd.f32 0.0, %v333
        %v335 = vpop.f32.mrf.mxu0
        %v336 = vadd.f32 0.0, %v335
        %337 = vdwg.mxu0
        %v338 = vadd.f32 %v297, %v334
        %v339 = vadd.f32 %v298, %v336
        %s340 = scalar_lea.vmem %s1, 32
        %v341 = vld [vmem:[%s340] sm:$0xf]
        %v342 = vld [vmem:[%s340 + $0x4] sm:$0xf]
        %v345 = vunpack.c.l.b16 %v341
        %v346 = vunpack.c.l.b16 %v342
        %v347 = vpack.c.b16 %v346, %v345
        %348 = vst [vmem:[#allocation1] ss:$4 sm:$0xff] %v189
        %v349 = vld.sshfl [vmem:[#allocation1] sm:$0xff pattern:$0x73625140]
        %v351 = vld.sshfl [vmem:[#allocation1 + $0x8] sm:$0xff pattern:$0x73625140]
        %353 = vrot.lane.b32.xlu0 %v349, 124
        %v354 = vpop.permute.xlu0 %353
        %355 = vrot.lane.b32.xlu0 %v351, 124
        %v356 = vpop.permute.xlu0 %355
        %vm357 = vcmask 1014784
        %v358 = vsel %vm357, %v354, %v356
        %v360 = vsel %vm212, %v347, 0
        %v363 = vsel %vm216, %v358, 0
        %365 = vmatpush.bf16.msra.mxu0 0
        %366 = vmatpush.bf16.msra.mxu0 0
        %367 = vmatpush.bf16.msra.mxu0 0
        %368 = vmatpush.bf16.msra.mxu0 0
        %369 = vmatpush.bf16.msra.mxu0 0
        %370 = vmatpush.bf16.msra.mxu0 0
        %371 = vmatpush.bf16.msra.mxu0 0
        %372 = vmatpush.bf16.msra.mxu0 %v363
        %373 = vmatmul.bf16.gmra.mxu0 %v360
        %v374 = vpop.f32.mrf.mxu0
        %v375 = vadd.f32 0.0, %v374
        %v376 = vpop.f32.mrf.mxu0
        %v377 = vadd.f32 0.0, %v376
        %378 = vdwg.mxu0
        %v379 = vadd.f32 %v338, %v375
        %v380 = vadd.f32 %v339, %v377
        %v381 = vld [vmem:[%s2] sm:$0xff]
        %v382 = vld [vmem:[%s2 + $0x8] sm:$0xff]
        %384 = vset.pattern.permute.xlu0 0
        %385 = vperm.xlu0 %384, %v381
        %v386 = vpop.permute.xlu0 %385
        %389 = vset.pattern.permute.xlu0 0
        %390 = vperm.xlu0 %389, %v382
        %v391 = vpop.permute.xlu0 %390
        %v393 = vadd.f32 %v379, %v386
        %v394 = vadd.f32 %v380, %v391
        %v395 = vmax.f32 %v393, 0.0
        %v396 = vmax.f32 %v394, 0.0
        %v397 = vpack.c.bf16 %v395, %v395
        %v398 = vpack.c.bf16 %v396, %v396
        %399 = vst [vmem:[%s177] sm:$0xf] %v397
        %400 = vst [vmem:[%s177 + $0x4] sm:$0xf] %v398
        %s401 = sand.u32 %s107, 1
        %s402 = scalar_lea.sflag [#allocation3], %s401
        %s403 = sand.u32 %s107, 1
        %s404 = smul.addr %s403, 8
        %s405 = scalar_lea.vmem [#allocation2], %s404
        // Predicated region
        $region33: #{tpu_custom_call.1} parent=31 // pred_check
          %p406 = pneg %p117
        $region34: #{tpu_custom_call.1} parent=31 // pred_check_branch
          %408 = sbr.rel (%p406) target = $region36
        $region35: #{tpu_custom_call.1} parent=31 // pred_region
          %410 = vsyncadd %s402, 0
          %s411 = smul.addr %s21, 2
          %s412 = sadd.s32 %s22, %s411
          %s413 = smul.addr %s412, 4
          %s414 = scalar_lea.hbm %s3, %s413
          %s415 = sshll.u32 %s405, 4
          %s416 = int_to_ptr.vmem [resolvable:$true] %s415
          %s417 = sshll.u32 %s414, 4
          %s418 = int_to_ptr.hbm [resolvable:$true] %s417
          %423 = dma.vmem_to_hbm [thread:$0]  %s416, 128, %s418, %s402, 64, 64, 4
        $region36: #{tpu_custom_call.1} parent=31 // pred_fallthru
          _
      $region32: #{tpu_custom_call.1} parent=5 // pred_fallthru
        _
      %p424 = scmp.le.s32.totalorder 2, %s12
      // Predicated region
      $region37: #{tpu_custom_call.1} parent=5 // pred_check
        %p425 = pneg %p424
      $region38: #{tpu_custom_call.1} parent=5 // pred_check_branch
        %427 = sbr.rel (%p425) target = $region40
      $region39: #{tpu_custom_call.1} parent=5 // pred_region
        %s428 = ssub.s32 %s12, 2
        // Predicated region
        $region41: #{tpu_custom_call.1} parent=39 // pred_check
          %p429 = pneg %p123
        $region42: #{tpu_custom_call.1} parent=39 // pred_check_branch
          %431 = sbr.rel (%p429) target = $region44
        $region43: #{tpu_custom_call.1} parent=39 // pred_region
          %s432 = sand.u32 %s108, 1
          %s433 = scalar_lea.sflag [#allocation3], %s432
          %s434 = sand.u32 %s108, 1
          %s435 = smul.addr %s434, 8
          %s436 = scalar_lea.vmem [#allocation2], %s435
          %438 = dma.done %s433, 128
        $region44: #{tpu_custom_call.1} parent=39 // pred_fallthru
          _
      $region40: #{tpu_custom_call.1} parent=5 // pred_fallthru
        _
    $region6: #{tpu_custom_call.1} parent=1 // loop_footer
      %s16 = sadd.s32 1, %s12
    $region7: #{tpu_custom_call.1} parent=1 // loop_footer_branch
      %11 = sbr.rel target = $region3
    $region8: #{tpu_custom_call.1} parent=1 // loop_exit
      _
    %439 = vsyncpa [#allocation3], 1
    %s440 = scalar_lea.sflag [#allocation3], 1
    %441 = vsyncpa %s440, 1

</llo_original>
